<compile_context>
chip_gen: v6e
topology: v6e:2x2x1
jax: 0.10.0
libtpu: 0.0.40
codegen_flags: <defaults>
</compile_context>

<pallas_src>
import functools

import jax
import jax.numpy as jnp
from jax.experimental import pallas as pl
from jax.experimental.pallas import tpu as pltpu


def _round_up(x, m):
    return ((x + m - 1) // m) * m


def _mvm_kernel(imgs_ref, caps_ref, out_ref):
    # imgs_ref: (r, tile_n, D)   caps_ref: (tile_c, D)   out_ref: (tile_n, tile_c)
    r = imgs_ref.shape[0]
    caps = caps_ref[...]  # (tile_c, D)

    def view_scores(v):
        # (tile_n, D) x (tile_c, D) contracting D -> (tile_n, tile_c), f32 on the MXU.
        return jax.lax.dot_general(
            imgs_ref[v],
            caps,
            dimension_numbers=(((1,), (1,)), ((), ())),
            preferred_element_type=jnp.float32,
        )

    acc = view_scores(0)
    for v in range(1, r):  # static unrolled loop; maximum-accumulate is pure VPU work
        acc = jnp.maximum(acc, view_scores(v))

    out_ref[...] = acc.astype(out_ref.dtype)


@functools.partial(jax.jit, static_argnames=("tile_n", "tile_c", "compute_dtype"))
def multi_view_matching(imgs, caps, *, tile_n=256, tile_c=256,
                        compute_dtype=jnp.bfloat16):
    """imgs: (N, r, D), caps: (C, D) -> scores: (N, C) = max over views of img.cap."""
    N, r, D = imgs.shape
    C, Dc = caps.shape
    assert D == Dc, "feature dims must match"

    # Clamp tiles for small problems so we do not pad 16 rows up to 256, while
    # keeping hardware-aligned tiles (tile_n multiple of 8, tile_c multiple of 128).
    tile_n = min(tile_n, _round_up(N, 8))
    tile_c = min(tile_c, _round_up(C, 128))

    N_pad = _round_up(N, tile_n)
    C_pad = _round_up(C, tile_c)
    D_pad = _round_up(D, 128)  # lane / MXU-K alignment; zero padding is exact for dots

    imgs_c = imgs.astype(compute_dtype)
    caps_c = caps.astype(compute_dtype)

    # Layout plumbing: (r, N, D) so each view is a contiguous (tile_n, D) slab in VMEM.
    imgs_t = jnp.transpose(imgs_c, (1, 0, 2))
    imgs_t = jnp.pad(imgs_t, ((0, 0), (0, N_pad - N), (0, D_pad - D)))
    caps_p = jnp.pad(caps_c, ((0, C_pad - C), (0, D_pad - D)))

    grid = (N_pad // tile_n, C_pad // tile_c)

    in_item = jnp.dtype(compute_dtype).itemsize
    # Double-buffered imgs + caps blocks, double-buffered f32 output block.
    vmem_need = (2 * r * tile_n * D_pad * in_item
                 + 2 * tile_c * D_pad * in_item
                 + 2 * tile_n * tile_c * 4)
    vmem_limit = int(min(max(3 * vmem_need, 32 * 1024 * 1024), 64 * 1024 * 1024))

    cost = pl.CostEstimate(
        flops=2 * N_pad * r * D_pad * C_pad,
        transcendentals=0,
        bytes_accessed=(imgs_t.size * in_item + caps_p.size * in_item
                        + N_pad * C_pad * 4),
    )

    out = pl.pallas_call(
        _mvm_kernel,
        out_shape=jax.ShapeDtypeStruct((N_pad, C_pad), jnp.float32),
        grid_spec=pltpu.PrefetchScalarGridSpec(
            num_scalar_prefetch=0,
            grid=grid,
            in_specs=[
                # Full r in the leading dim; (tile_n, D_pad) trailing dims are
                # (8,128)-aligned.
                pl.BlockSpec((r, tile_n, D_pad), lambda i, j: (0, i, 0)),
                # Captions tiled along C so VMEM stays bounded and output stores
                # are lane-dense.
                pl.BlockSpec((tile_c, D_pad), lambda i, j: (j, 0)),
            ],
            out_specs=pl.BlockSpec((tile_n, tile_c), lambda i, j: (i, j)),
        ),
        compiler_params=pltpu.CompilerParams(
            dimension_semantics=("parallel", "parallel"),
            vmem_limit_bytes=vmem_limit,
        ),
        cost_estimate=cost,
    )(imgs_t, caps_p)

    # Drop padded image rows / caption columns (padding never affects real entries:
    # the max is over views, which are not padded).
    return out[:N, :C]


def _reference(imgs, caps):
    # Pure-JAX reference mirroring the PyTorch module (both branches give this).
    s = jnp.einsum("nrd,cd->nrc", imgs, caps)  # (N, r, C)
    return jnp.max(s, axis=1)                  # (N, C)


if __name__ == "__main__":
    key = jax.random.PRNGKey(0)
    k_img, k_cap, k_cap_eq = jax.random.split(key, 3)

    N, r, D = 16, 4, 32

    imgs = jax.random.normal(k_img, (N, r, D), dtype=jnp.float32)

    # Case A: num_caps != num_imgs (the PyTorch "else" branch).
    caps_a = jax.random.normal(k_cap, (8, D), dtype=jnp.float32)
    # Case B: num_caps == num_imgs (the PyTorch "if" branch).
    caps_b = jax.random.normal(k_cap_eq, (N, D), dtype=jnp.float32)

    ref_a = _reference(imgs, caps_a)
    ref_b = _reference(imgs, caps_b)

    # Exact f32 path.
    out_a_f32 = multi_view_matching(imgs, caps_a, compute_dtype=jnp.float32)
    out_b_f32 = multi_view_matching(imgs, caps_b, compute_dtype=jnp.float32)
    jax.block_until_ready((out_a_f32, out_b_f32))
    assert out_a_f32.shape == (N, 8) and out_b_f32.shape == (N, N)
    assert jnp.allclose(out_a_f32, ref_a, atol=1e-5, rtol=1e-5)
    assert jnp.allclose(out_b_f32, ref_b, atol=1e-5, rtol=1e-5)

    # Default fast path: bf16 matmul inputs, f32 MXU accumulation (looser tolerance).
    out_a = multi_view_matching(imgs, caps_a)
    out_b = multi_view_matching(imgs, caps_b)
    jax.block_until_ready((out_a, out_b))
    assert out_a.shape == (N, 8) and out_b.shape == (N, N)
    assert jnp.allclose(out_a, ref_a, atol=2e-1, rtol=2e-2)
    assert jnp.allclose(out_b, ref_b, atol=2e-1, rtol=2e-2)

    print("KERNEL_OK")
</pallas_src>

<mosaic_0001>
module attributes {stable_mosaic.version = 11 : i64} {
  func.func @_mvm_kernel(%arg0: i32, %arg1: i32, %arg2: memref<4x16x128xf32, #tpu.memory_space<vmem>>, %arg3: memref<128x128xf32, #tpu.memory_space<vmem>>, %arg4: memref<16x128xf32, #tpu.memory_space<vmem>>) attributes {dimension_semantics = [#tpu.dimension_semantics<parallel>, #tpu.dimension_semantics<parallel>], iteration_bounds = array<i64: 1, 1>, scalar_prefetch = 0 : i64, scratch_operands = 0 : i64, tpu.core_type = #tpu.core_type<tc>, window_params = [{transform_indices = @transform_0, window_bounds = array<i64: 4, 16, 128>}, {transform_indices = @transform_1, window_bounds = array<i64: 128, 128>}, {transform_indices = @transform_2, window_bounds = array<i64: 16, 128>}]} {
    %c0 = arith.constant 0 : index
    %c0_0 = arith.constant 0 : index
    %0 = vector.load %arg3[%c0, %c0_0] : memref<128x128xf32, #tpu.memory_space<vmem>>, vector<128x128xf32>
    %c0_1 = arith.constant 0 : index
    %c0_2 = arith.constant 0 : index
    %c0_3 = arith.constant 0 : index
    %1 = vector.load %arg2[%c0_1, %c0_2, %c0_3] : memref<4x16x128xf32, #tpu.memory_space<vmem>>, vector<1x16x128xf32>
    %2 = vector.shape_cast %1 : vector<1x16x128xf32> to vector<16x128xf32>
    %cst = arith.constant dense<0.000000e+00> : vector<16x128xf32>
    %3 = tpu.matmul %2, %0, %cst {dimension_numbers = #tpu.dot_dimension_numbers<[1], [1], [0], [0], [0, 0, 1, 0], [], []>} : vector<16x128xf32>, vector<128x128xf32>, vector<16x128xf32> -> vector<16x128xf32>
    %c1 = arith.constant 1 : index
    %c0_4 = arith.constant 0 : index
    %c0_5 = arith.constant 0 : index
    %4 = vector.load %arg2[%c1, %c0_4, %c0_5] : memref<4x16x128xf32, #tpu.memory_space<vmem>>, vector<1x16x128xf32>
    %5 = vector.shape_cast %4 : vector<1x16x128xf32> to vector<16x128xf32>
    %cst_6 = arith.constant dense<0.000000e+00> : vector<16x128xf32>
    %6 = tpu.matmul %5, %0, %cst_6 {dimension_numbers = #tpu.dot_dimension_numbers<[1], [1], [0], [0], [0, 0, 1, 0], [], []>} : vector<16x128xf32>, vector<128x128xf32>, vector<16x128xf32> -> vector<16x128xf32>
    %7 = arith.maximumf %3, %6 : vector<16x128xf32>
    %c2 = arith.constant 2 : index
    %c0_7 = arith.constant 0 : index
    %c0_8 = arith.constant 0 : index
    %8 = vector.load %arg2[%c2, %c0_7, %c0_8] : memref<4x16x128xf32, #tpu.memory_space<vmem>>, vector<1x16x128xf32>
    %9 = vector.shape_cast %8 : vector<1x16x128xf32> to vector<16x128xf32>
    %cst_9 = arith.constant dense<0.000000e+00> : vector<16x128xf32>
    %10 = tpu.matmul %9, %0, %cst_9 {dimension_numbers = #tpu.dot_dimension_numbers<[1], [1], [0], [0], [0, 0, 1, 0], [], []>} : vector<16x128xf32>, vector<128x128xf32>, vector<16x128xf32> -> vector<16x128xf32>
    %11 = arith.maximumf %7, %10 : vector<16x128xf32>
    %c3 = arith.constant 3 : index
    %c0_10 = arith.constant 0 : index
    %c0_11 = arith.constant 0 : index
    %12 = vector.load %arg2[%c3, %c0_10, %c0_11] : memref<4x16x128xf32, #tpu.memory_space<vmem>>, vector<1x16x128xf32>
    %13 = vector.shape_cast %12 : vector<1x16x128xf32> to vector<16x128xf32>
    %cst_12 = arith.constant dense<0.000000e+00> : vector<16x128xf32>
    %14 = tpu.matmul %13, %0, %cst_12 {dimension_numbers = #tpu.dot_dimension_numbers<[1], [1], [0], [0], [0, 0, 1, 0], [], []>} : vector<16x128xf32>, vector<128x128xf32>, vector<16x128xf32> -> vector<16x128xf32>
    %15 = arith.maximumf %11, %14 : vector<16x128xf32>
    %c0_13 = arith.constant 0 : index
    %c0_14 = arith.constant 0 : index
    %16 = vector.load %arg4[%c0_13, %c0_14] : memref<16x128xf32, #tpu.memory_space<vmem>>, vector<16x128xf32>
    tpu.vector_store %arg4[%c0_13, %c0_14], %15 {strides = array<i32>} : memref<16x128xf32, #tpu.memory_space<vmem>>, vector<16x128xf32>,
    return
  }
  func.func @transform_0(%arg0: i32, %arg1: i32) -> (i32, i32, i32) {
    %c0_i32 = arith.constant 0 : i32
    %c0_i32_0 = arith.constant 0 : i32
    %c0_i32_1 = arith.constant 0 : i32
    return %c0_i32, %arg0, %c0_i32_0 : i32, i32, i32
  }
  func.func @transform_1(%arg0: i32, %arg1: i32) -> (i32, i32) {
    %c0_i32 = arith.constant 0 : i32
    %c0_i32_0 = arith.constant 0 : i32
    return %arg1, %c0_i32 : i32, i32
  }
  func.func @transform_2(%arg0: i32, %arg1: i32) -> (i32, i32) {
    %c0_i32 = arith.constant 0 : i32
    return %arg0, %arg1 : i32, i32
  }
}

</mosaic_0001>

<llo_original>
// kernel: multi_view_matching.1
$region0: #{multi_view_matching.1}
  #allocation0 [shape = 'u32[]', space=smem, size = 0x4, offset = 0x4, fixed_abs, tag = 'smem constant byte address 0x4 - core index']
  #allocation1 [shape = 'u32[144,128]{1,0:T(1,128)}', space=vmem, size = 0x12000, scoped, tag = 'internal scratch']
  %s0 = inlined_call_operand.vmem [shape: f32[4,16,128], index: 0, kind: input, shape index: {}]
  %s1 = inlined_call_operand.vmem [shape: f32[128,128], index: 1, kind: input, shape index: {}]
  %s2 = inlined_call_operand.vmem [shape: f32[16,128], index: 2, kind: output, shape index: {}]
  %s3 = sld [smem:[#allocation0]]
  $region18: #{multi_view_matching.1} parent=0
    _
  %s5 = ssub.s32 1, %s3
  %s6 = scalar_select 0, %s5, %s3
  // Predicated region
  $region2: #{multi_view_matching.1} parent=0 // pred_check
    _
  $region3: #{multi_view_matching.1} parent=0 // pred_check_branch
    %8 = sbr.rel (0) target = $region5
  $region4: #{multi_view_matching.1} parent=0 // pred_region
    _
  $region5: #{multi_view_matching.1} parent=0 // pred_fallthru
    _
  // Predicated region
  $region6: #{multi_view_matching.1} parent=0 // pred_check
    _
  $region7: #{multi_view_matching.1} parent=0 // pred_check_branch
    %10 = sbr.rel (0) target = $region9
  $region8: #{multi_view_matching.1} parent=0 // pred_region
    _
  $region9: #{multi_view_matching.1} parent=0 // pred_fallthru
    _
  %v11 = vld [vmem:[%s1] sm:$0xff]
  %v12 = vld [vmem:[%s1 + $0x8] sm:$0xff]
  %v13 = vld [vmem:[%s1 + $0x10] sm:$0xff]
  %v14 = vld [vmem:[%s1 + $0x18] sm:$0xff]
  %v15 = vld [vmem:[%s1 + $0x20] sm:$0xff]
  %v16 = vld [vmem:[%s1 + $0x28] sm:$0xff]
  %v17 = vld [vmem:[%s1 + $0x30] sm:$0xff]
  %v18 = vld [vmem:[%s1 + $0x38] sm:$0xff]
  %v19 = vld [vmem:[%s1 + $0x40] sm:$0xff]
  %v20 = vld [vmem:[%s1 + $0x48] sm:$0xff]
  %v21 = vld [vmem:[%s1 + $0x50] sm:$0xff]
  %v22 = vld [vmem:[%s1 + $0x58] sm:$0xff]
  %v23 = vld [vmem:[%s1 + $0x60] sm:$0xff]
  %v24 = vld [vmem:[%s1 + $0x68] sm:$0xff]
  %v25 = vld [vmem:[%s1 + $0x70] sm:$0xff]
  %v26 = vld [vmem:[%s1 + $0x78] sm:$0xff]
  %v27 = vld [vmem:[%s0] sm:$0xff]
  %v28 = vld [vmem:[%s0 + $0x8] sm:$0xff]
  %29 = vmatprep.subr.mxu0 0.0
  %30 = vmatpush1.xpose.msra.mxu0 %v26
  %31 = vmatprep.subr.mxu0 0.0
  %32 = vmatpush1.xpose.msra.mxu0 %v25
  %33 = vmatprep.subr.mxu0 0.0
  %34 = vmatpush1.xpose.msra.mxu0 %v24
  %35 = vmatprep.subr.mxu0 0.0
  %36 = vmatpush1.xpose.msra.mxu0 %v23
  %37 = vmatprep.subr.mxu0 0.0
  %38 = vmatpush1.xpose.msra.mxu0 %v22
  %39 = vmatprep.subr.mxu0 0.0
  %40 = vmatpush1.xpose.msra.mxu0 %v21
  %41 = vmatprep.subr.mxu0 0.0
  %42 = vmatpush1.xpose.msra.mxu0 %v20
  %43 = vmatprep.subr.mxu0 0.0
  %44 = vmatpush1.xpose.msra.mxu0 %v19
  %45 = vmatprep.subr.mxu0 0.0
  %46 = vmatpush1.xpose.msra.mxu0 %v18
  %47 = vmatprep.subr.mxu0 0.0
  %48 = vmatpush1.xpose.msra.mxu0 %v17
  %49 = vmatprep.subr.mxu0 0.0
  %50 = vmatpush1.xpose.msra.mxu0 %v16
  %51 = vmatprep.subr.mxu0 0.0
  %52 = vmatpush1.xpose.msra.mxu0 %v15
  %53 = vmatprep.subr.mxu0 0.0
  %54 = vmatpush1.xpose.msra.mxu0 %v14
  %55 = vmatprep.subr.mxu0 0.0
  %56 = vmatpush1.xpose.msra.mxu0 %v13
  %57 = vmatprep.subr.mxu0 0.0
  %58 = vmatpush1.xpose.msra.mxu0 %v12
  %59 = vmatprep.subr.mxu0 0.0
  %60 = vmatpush1.xpose.msra.mxu0 %v11
  %61 = vmatprep.subr.mxu0 0.0
  %62 = vmatpush2.xpose.msra.mxu0 0.0
  %63 = vmatprep.subr.mxu0 0.0
  %64 = vmatpush2.xpose.msra.mxu0 0.0
  %65 = vmatprep.subr.mxu0 0.0
  %66 = vmatpush2.xpose.msra.mxu0 0.0
  %67 = vmatprep.subr.mxu0 0.0
  %68 = vmatpush2.xpose.msra.mxu0 0.0
  %69 = vmatprep.subr.mxu0 0.0
  %70 = vmatpush2.xpose.msra.mxu0 0.0
  %71 = vmatprep.subr.mxu0 0.0
  %72 = vmatpush2.xpose.msra.mxu0 0.0
  %73 = vmatprep.subr.mxu0 0.0
  %74 = vmatpush2.xpose.msra.mxu0 0.0
  %75 = vmatprep.subr.mxu0 0.0
  %76 = vmatpush2.xpose.msra.mxu0 0.0
  %77 = vmatprep.subr.mxu0 0.0
  %78 = vmatpush2.xpose.msra.mxu0 0.0
  %79 = vmatprep.subr.mxu0 0.0
  %80 = vmatpush2.xpose.msra.mxu0 0.0
  %81 = vmatprep.subr.mxu0 0.0
  %82 = vmatpush2.xpose.msra.mxu0 0.0
  %83 = vmatprep.subr.mxu0 0.0
  %84 = vmatpush2.xpose.msra.mxu0 0.0
  %85 = vmatprep.subr.mxu0 0.0
  %86 = vmatpush2.xpose.msra.mxu0 0.0
  %87 = vmatprep.subr.mxu0 0.0
  %88 = vmatpush2.xpose.msra.mxu0 0.0
  %89 = vmatprep.subr.mxu0 0.0
  %90 = vmatpush2.xpose.msra.mxu0 0.0
  %91 = vmatprep.subr.mxu0 0.0
  %92 = vmatpush2.xpose.msra.mxu0 0.0
  %93 = vmatprep.mubr.f32.mxu0 0.0
  %94 = vmatmul.mubr.f32.gmra.mxu0 %v27
  %v95 = vpop.f32.mrf.mxu0
  %v96 = vadd.f32 0.0, %v95
  %v97 = vpop.f32.mrf.mxu0
  %98 = vmatprep.mubr.f32.mxu0 0.0
  %99 = vmatmul.mubr.f32.gmra.mxu0 %v28
  %v100 = vpop.f32.mrf.mxu0
  %v101 = vadd.f32 0.0, %v100
  %v102 = vpop.f32.mrf.mxu0
  %103 = vdwg.mxu0
  %s104 = scalar_lea.vmem %s0, 16
  %v105 = vld [vmem:[%s104] sm:$0xff]
  %v106 = vld [vmem:[%s104 + $0x8] sm:$0xff]
  %107 = vmatprep.subr.mxu0 0.0
  %108 = vmatpush1.xpose.msra.mxu0 %v26
  %109 = vmatprep.subr.mxu0 0.0
  %110 = vmatpush1.xpose.msra.mxu0 %v25
  %111 = vmatprep.subr.mxu0 0.0
  %112 = vmatpush1.xpose.msra.mxu0 %v24
  %113 = vmatprep.subr.mxu0 0.0
  %114 = vmatpush1.xpose.msra.mxu0 %v23
  %115 = vmatprep.subr.mxu0 0.0
  %116 = vmatpush1.xpose.msra.mxu0 %v22
  %117 = vmatprep.subr.mxu0 0.0
  %118 = vmatpush1.xpose.msra.mxu0 %v21
  %119 = vmatprep.subr.mxu0 0.0
  %120 = vmatpush1.xpose.msra.mxu0 %v20
  %121 = vmatprep.subr.mxu0 0.0
  %122 = vmatpush1.xpose.msra.mxu0 %v19
  %123 = vmatprep.subr.mxu0 0.0
  %124 = vmatpush1.xpose.msra.mxu0 %v18
  %125 = vmatprep.subr.mxu0 0.0
  %126 = vmatpush1.xpose.msra.mxu0 %v17
  %127 = vmatprep.subr.mxu0 0.0
  %128 = vmatpush1.xpose.msra.mxu0 %v16
  %129 = vmatprep.subr.mxu0 0.0
  %130 = vmatpush1.xpose.msra.mxu0 %v15
  %131 = vmatprep.subr.mxu0 0.0
  %132 = vmatpush1.xpose.msra.mxu0 %v14
  %133 = vmatprep.subr.mxu0 0.0
  %134 = vmatpush1.xpose.msra.mxu0 %v13
  %135 = vmatprep.subr.mxu0 0.0
  %136 = vmatpush1.xpose.msra.mxu0 %v12
  %137 = vmatprep.subr.mxu0 0.0
  %138 = vmatpush1.xpose.msra.mxu0 %v11
  %139 = vmatprep.subr.mxu0 0.0
  %140 = vmatpush2.xpose.msra.mxu0 0.0
  %141 = vmatprep.subr.mxu0 0.0
  %142 = vmatpush2.xpose.msra.mxu0 0.0
  %143 = vmatprep.subr.mxu0 0.0
  %144 = vmatpush2.xpose.msra.mxu0 0.0
  %145 = vmatprep.subr.mxu0 0.0
  %146 = vmatpush2.xpose.msra.mxu0 0.0
  %147 = vmatprep.subr.mxu0 0.0
  %148 = vmatpush2.xpose.msra.mxu0 0.0
  %149 = vmatprep.subr.mxu0 0.0
  %150 = vmatpush2.xpose.msra.mxu0 0.0
  %151 = vmatprep.subr.mxu0 0.0
  %152 = vmatpush2.xpose.msra.mxu0 0.0
  %153 = vmatprep.subr.mxu0 0.0
  %154 = vmatpush2.xpose.msra.mxu0 0.0
  %155 = vmatprep.subr.mxu0 0.0
  %156 = vmatpush2.xpose.msra.mxu0 0.0
  %157 = vmatprep.subr.mxu0 0.0
  %158 = vmatpush2.xpose.msra.mxu0 0.0
  %159 = vmatprep.subr.mxu0 0.0
  %160 = vmatpush2.xpose.msra.mxu0 0.0
  %161 = vmatprep.subr.mxu0 0.0
  %162 = vmatpush2.xpose.msra.mxu0 0.0
  %163 = vmatprep.subr.mxu0 0.0
  %164 = vmatpush2.xpose.msra.mxu0 0.0
  %165 = vmatprep.subr.mxu0 0.0
  %166 = vmatpush2.xpose.msra.mxu0 0.0
  %167 = vmatprep.subr.mxu0 0.0
  %168 = vmatpush2.xpose.msra.mxu0 0.0
  %169 = vmatprep.subr.mxu0 0.0
  %170 = vmatpush2.xpose.msra.mxu0 0.0
  %171 = vmatprep.mubr.f32.mxu0 0.0
  %172 = vmatmul.mubr.f32.gmra.mxu0 %v105
  %v173 = vpop.f32.mrf.mxu0
  %v174 = vadd.f32 0.0, %v173
  %v175 = vpop.f32.mrf.mxu0
  %176 = vmatprep.mubr.f32.mxu0 0.0
  %177 = vmatmul.mubr.f32.gmra.mxu0 %v106
  %v178 = vpop.f32.mrf.mxu0
  %v179 = vadd.f32 0.0, %v178
  %v180 = vpop.f32.mrf.mxu0
  %181 = vdwg.mxu0
  %v182 = vmax.f32 %v96, %v174
  %v183 = vmax.f32 %v101, %v179
  %s184 = scalar_lea.vmem %s0, 32
  %v185 = vld [vmem:[%s184] sm:$0xff]
  %v186 = vld [vmem:[%s184 + $0x8] sm:$0xff]
  %187 = vmatprep.subr.mxu0 0.0
  %188 = vmatpush1.xpose.msra.mxu0 %v26
  %189 = vmatprep.subr.mxu0 0.0
  %190 = vmatpush1.xpose.msra.mxu0 %v25
  %191 = vmatprep.subr.mxu0 0.0
  %192 = vmatpush1.xpose.msra.mxu0 %v24
  %193 = vmatprep.subr.mxu0 0.0
  %194 = vmatpush1.xpose.msra.mxu0 %v23
  %195 = vmatprep.subr.mxu0 0.0
  %196 = vmatpush1.xpose.msra.mxu0 %v22
  %197 = vmatprep.subr.mxu0 0.0
  %198 = vmatpush1.xpose.msra.mxu0 %v21
  %199 = vmatprep.subr.mxu0 0.0
  %200 = vmatpush1.xpose.msra.mxu0 %v20
  %201 = vmatprep.subr.mxu0 0.0
  %202 = vmatpush1.xpose.msra.mxu0 %v19
  %203 = vmatprep.subr.mxu0 0.0
  %204 = vmatpush1.xpose.msra.mxu0 %v18
  %205 = vmatprep.subr.mxu0 0.0
  %206 = vmatpush1.xpose.msra.mxu0 %v17
  %207 = vmatprep.subr.mxu0 0.0
  %208 = vmatpush1.xpose.msra.mxu0 %v16
  %209 = vmatprep.subr.mxu0 0.0
  %210 = vmatpush1.xpose.msra.mxu0 %v15
  %211 = vmatprep.subr.mxu0 0.0
  %212 = vmatpush1.xpose.msra.mxu0 %v14
  %213 = vmatprep.subr.mxu0 0.0
  %214 = vmatpush1.xpose.msra.mxu0 %v13
  %215 = vmatprep.subr.mxu0 0.0
  %216 = vmatpush1.xpose.msra.mxu0 %v12
  %217 = vmatprep.subr.mxu0 0.0
  %218 = vmatpush1.xpose.msra.mxu0 %v11
  %219 = vmatprep.subr.mxu0 0.0
  %220 = vmatpush2.xpose.msra.mxu0 0.0
  %221 = vmatprep.subr.mxu0 0.0
  %222 = vmatpush2.xpose.msra.mxu0 0.0
  %223 = vmatprep.subr.mxu0 0.0
  %224 = vmatpush2.xpose.msra.mxu0 0.0
  %225 = vmatprep.subr.mxu0 0.0
  %226 = vmatpush2.xpose.msra.mxu0 0.0
  %227 = vmatprep.subr.mxu0 0.0
  %228 = vmatpush2.xpose.msra.mxu0 0.0
  %229 = vmatprep.subr.mxu0 0.0
  %230 = vmatpush2.xpose.msra.mxu0 0.0
  %231 = vmatprep.subr.mxu0 0.0
  %232 = vmatpush2.xpose.msra.mxu0 0.0
  %233 = vmatprep.subr.mxu0 0.0
  %234 = vmatpush2.xpose.msra.mxu0 0.0
  %235 = vmatprep.subr.mxu0 0.0
  %236 = vmatpush2.xpose.msra.mxu0 0.0
  %237 = vmatprep.subr.mxu0 0.0
  %238 = vmatpush2.xpose.msra.mxu0 0.0
  %239 = vmatprep.subr.mxu0 0.0
  %240 = vmatpush2.xpose.msra.mxu0 0.0
  %241 = vmatprep.subr.mxu0 0.0
  %242 = vmatpush2.xpose.msra.mxu0 0.0
  %243 = vmatprep.subr.mxu0 0.0
  %244 = vmatpush2.xpose.msra.mxu0 0.0
  %245 = vmatprep.subr.mxu0 0.0
  %246 = vmatpush2.xpose.msra.mxu0 0.0
  %247 = vmatprep.subr.mxu0 0.0
  %248 = vmatpush2.xpose.msra.mxu0 0.0
  %249 = vmatprep.subr.mxu0 0.0
  %250 = vmatpush2.xpose.msra.mxu0 0.0
  %251 = vmatprep.mubr.f32.mxu0 0.0
  %252 = vmatmul.mubr.f32.gmra.mxu0 %v185
  %v253 = vpop.f32.mrf.mxu0
  %v254 = vadd.f32 0.0, %v253
  %v255 = vpop.f32.mrf.mxu0
  %256 = vmatprep.mubr.f32.mxu0 0.0
  %257 = vmatmul.mubr.f32.gmra.mxu0 %v186
  %v258 = vpop.f32.mrf.mxu0
  %v259 = vadd.f32 0.0, %v258
  %v260 = vpop.f32.mrf.mxu0
  %261 = vdwg.mxu0
  %v262 = vmax.f32 %v182, %v254
  %v263 = vmax.f32 %v183, %v259
  %s264 = scalar_lea.vmem %s0, 48
  %v265 = vld [vmem:[%s264] sm:$0xff]
  %v266 = vld [vmem:[%s264 + $0x8] sm:$0xff]
  %267 = vmatprep.subr.mxu0 0.0
  %268 = vmatpush1.xpose.msra.mxu0 %v26
  %269 = vmatprep.subr.mxu0 0.0
  %270 = vmatpush1.xpose.msra.mxu0 %v25
  %271 = vmatprep.subr.mxu0 0.0
  %272 = vmatpush1.xpose.msra.mxu0 %v24
  %273 = vmatprep.subr.mxu0 0.0
  %274 = vmatpush1.xpose.msra.mxu0 %v23
  %275 = vmatprep.subr.mxu0 0.0
  %276 = vmatpush1.xpose.msra.mxu0 %v22
  %277 = vmatprep.subr.mxu0 0.0
  %278 = vmatpush1.xpose.msra.mxu0 %v21
  %279 = vmatprep.subr.mxu0 0.0
  %280 = vmatpush1.xpose.msra.mxu0 %v20
  %281 = vmatprep.subr.mxu0 0.0
  %282 = vmatpush1.xpose.msra.mxu0 %v19
  %283 = vmatprep.subr.mxu0 0.0
  %284 = vmatpush1.xpose.msra.mxu0 %v18
  %285 = vmatprep.subr.mxu0 0.0
  %286 = vmatpush1.xpose.msra.mxu0 %v17
  %287 = vmatprep.subr.mxu0 0.0
  %288 = vmatpush1.xpose.msra.mxu0 %v16
  %289 = vmatprep.subr.mxu0 0.0
  %290 = vmatpush1.xpose.msra.mxu0 %v15
  %291 = vmatprep.subr.mxu0 0.0
  %292 = vmatpush1.xpose.msra.mxu0 %v14
  %293 = vmatprep.subr.mxu0 0.0
  %294 = vmatpush1.xpose.msra.mxu0 %v13
  %295 = vmatprep.subr.mxu0 0.0
  %296 = vmatpush1.xpose.msra.mxu0 %v12
  %297 = vmatprep.subr.mxu0 0.0
  %298 = vmatpush1.xpose.msra.mxu0 %v11
  %299 = vmatprep.subr.mxu0 0.0
  %300 = vmatpush2.xpose.msra.mxu0 0.0
  %301 = vmatprep.subr.mxu0 0.0
  %302 = vmatpush2.xpose.msra.mxu0 0.0
  %303 = vmatprep.subr.mxu0 0.0
  %304 = vmatpush2.xpose.msra.mxu0 0.0
  %305 = vmatprep.subr.mxu0 0.0
  %306 = vmatpush2.xpose.msra.mxu0 0.0
  %307 = vmatprep.subr.mxu0 0.0
  %308 = vmatpush2.xpose.msra.mxu0 0.0
  %309 = vmatprep.subr.mxu0 0.0
  %310 = vmatpush2.xpose.msra.mxu0 0.0
  %311 = vmatprep.subr.mxu0 0.0
  %312 = vmatpush2.xpose.msra.mxu0 0.0
  %313 = vmatprep.subr.mxu0 0.0
  %314 = vmatpush2.xpose.msra.mxu0 0.0
  %315 = vmatprep.subr.mxu0 0.0
  %316 = vmatpush2.xpose.msra.mxu0 0.0
  %317 = vmatprep.subr.mxu0 0.0
  %318 = vmatpush2.xpose.msra.mxu0 0.0
  %319 = vmatprep.subr.mxu0 0.0
  %320 = vmatpush2.xpose.msra.mxu0 0.0
  %321 = vmatprep.subr.mxu0 0.0
  %322 = vmatpush2.xpose.msra.mxu0 0.0
  %323 = vmatprep.subr.mxu0 0.0
  %324 = vmatpush2.xpose.msra.mxu0 0.0
  %325 = vmatprep.subr.mxu0 0.0
  %326 = vmatpush2.xpose.msra.mxu0 0.0
  %327 = vmatprep.subr.mxu0 0.0
  %328 = vmatpush2.xpose.msra.mxu0 0.0
  %329 = vmatprep.subr.mxu0 0.0
  %330 = vmatpush2.xpose.msra.mxu0 0.0
  %331 = vmatprep.mubr.f32.mxu0 0.0
  %332 = vmatmul.mubr.f32.gmra.mxu0 %v265
  %v333 = vpop.f32.mrf.mxu0
  %v334 = vadd.f32 0.0, %v333
  %v335 = vpop.f32.mrf.mxu0
  %336 = vmatprep.mubr.f32.mxu0 0.0
  %337 = vmatmul.mubr.f32.gmra.mxu0 %v266
  %v338 = vpop.f32.mrf.mxu0
  %v339 = vadd.f32 0.0, %v338
  %v340 = vpop.f32.mrf.mxu0
  %341 = vdwg.mxu0
  %v342 = vmax.f32 %v262, %v334
  %v343 = vmax.f32 %v263, %v339
  %344 = vst [vmem:[%s2] sm:$0xff] %v342
  %345 = vst [vmem:[%s2 + $0x8] sm:$0xff] %v343
  // Predicated region
  $region10: #{multi_view_matching.1} parent=0 // pred_check
    _
  $region11: #{multi_view_matching.1} parent=0 // pred_check_branch
    %347 = sbr.rel (0) target = $region13
  $region12: #{multi_view_matching.1} parent=0 // pred_region
    _
  $region13: #{multi_view_matching.1} parent=0 // pred_fallthru
    _
  // Predicated region
  $region14: #{multi_view_matching.1} parent=0 // pred_check
    _
  $region15: #{multi_view_matching.1} parent=0 // pred_check_branch
    %349 = sbr.rel (0) target = $region17
  $region16: #{multi_view_matching.1} parent=0 // pred_region
    _
  $region17: #{multi_view_matching.1} parent=0 // pred_fallthru
    _

</llo_original>
